<compile_context>
chip_gen: v7x
topology: tpu7x:2x2x1
jax: 0.10.0
libtpu: 0.0.40
codegen_flags: <defaults>
</compile_context>

<pallas_src>
import jax
import jax.numpy as jnp
from jax.experimental import pallas as pl
from jax.experimental.pallas import tpu as pltpu

_LANES = 128
_SUBLANES = 8
_DEFAULT_TILE_ROWS = 2048     # 2048 * 128 * 4B = 1 MiB per buffer (~4 MiB double-buffered in+out)
_PALLAS_MIN_ELEMS = 16 * 1024  # below this, XLA-fused jnp beats the pallas_call overhead


def _linear_policy_kernel(slope_ref, state_ref, out_ref):
    # slope_ref: (1,) in SMEM; state_ref / out_ref: (tile_rows, 128) VMEM tiles.
    slope = slope_ref[0]
    s = state_ref[...]
    # (s - clip(s, 0.97, 1.03)) == max(s - 1.03, 0) - max(0.97 - s, 0)
    out_ref[...] = (s - jnp.clip(s, 0.97, 1.03)) * (slope * slope)


def _linear_policy_ref(state, slope_scalar):
    """Plain-JAX reference (also used as the tiny-input fast path)."""
    return (jnp.maximum(state - 1.03, 0.0)
            - jnp.maximum(0.97 - state, 0.0)) * (slope_scalar * slope_scalar)


def linear_policy_forward(state: jax.Array, slope: jax.Array, *,
                          tile_rows: int = _DEFAULT_TILE_ROWS,
                          force_pallas: bool = False) -> jax.Array:
    """state: (B, D) array; slope: scalar parameter of shape (1,) (or scalar)."""
    assert state.ndim == 2
    orig_shape = state.shape
    orig_dtype = state.dtype
    slope_f32 = jnp.asarray(slope, dtype=jnp.float32).reshape((1,))
    n = state.size

    if n < _PALLAS_MIN_ELEMS and not force_pallas:
        # Tiny input: a pallas_call is 100% launch overhead here; let XLA fuse it.
        return _linear_policy_ref(state.astype(jnp.float32), slope_f32[0]).astype(orig_dtype)

    # Lane-dense layout: flatten, pad to a multiple of 8*128, view as (rows, 128).
    flat = state.reshape(-1).astype(jnp.float32)
    chunk = _SUBLANES * _LANES
    n_pad = pl.cdiv(n, chunk) * chunk
    if n_pad != n:
        flat = jnp.pad(flat, (0, n_pad - n))
    rows = n_pad // _LANES
    slab = flat.reshape(rows, _LANES)

    # Tile rows: multiple of 8 sublanes, capped at the full slab.
    tb = min(tile_rows, rows)
    tb = max(_SUBLANES, (tb // _SUBLANES) * _SUBLANES)
    grid = (pl.cdiv(rows, tb),)

    out = pl.pallas_call(
        _linear_policy_kernel,
        out_shape=jax.ShapeDtypeStruct((rows, _LANES), jnp.float32),
        grid=grid,
        in_specs=[
            pl.BlockSpec(memory_space=pltpu.SMEM),          # slope scalar
            pl.BlockSpec((tb, _LANES), lambda i: (i, 0)),   # state tile
        ],
        out_specs=pl.BlockSpec((tb, _LANES), lambda i: (i, 0)),
        compiler_params=pltpu.CompilerParams(
            dimension_semantics=("parallel",),              # megacore on v7x, neutral elsewhere
        ),
    )(slope_f32, slab)

    return out.reshape(-1)[:n].reshape(orig_shape).astype(orig_dtype)


if __name__ == "__main__":
    key = jax.random.PRNGKey(0)
    k1, k2 = jax.random.split(key)

    # Module-shaped input: state is (batch, obs_dim), values around the deadband.
    batch, obs_dim = 2, 16
    state_small = 0.9 + 0.2 * jax.random.uniform(k1, (batch, obs_dim), dtype=jnp.float32)
    # nn.Parameter init is torch.ones(1); use a non-trivial value to exercise slope**2.
    slope = jnp.array([1.3], dtype=jnp.float32)

    # 1) Force the Pallas path on the small module-shaped input.
    out_small = linear_policy_forward(state_small, slope, force_pallas=True)
    jax.block_until_ready(out_small)
    ref_small = _linear_policy_ref(state_small, slope[0])
    assert jnp.allclose(out_small, ref_small, atol=1e-6, rtol=1e-6), "pallas (small) mismatch"

    # 2) Multi-block tiled path (grid > 1, padding exercised) on a modest batch.
    big_b, big_d = 512, 48
    state_big = 0.9 + 0.2 * jax.random.uniform(k2, (big_b, big_d), dtype=jnp.float32)
    out_big = linear_policy_forward(state_big, slope, tile_rows=64, force_pallas=True)
    jax.block_until_ready(out_big)
    ref_big = _linear_policy_ref(state_big, slope[0])
    assert jnp.allclose(out_big, ref_big, atol=1e-6, rtol=1e-6), "pallas (tiled) mismatch"

    # 3) Default dispatch on the tiny shape takes the plain-jnp bypass.
    out_bypass = linear_policy_forward(state_small, slope)
    assert jnp.allclose(out_bypass, ref_small, atol=1e-6, rtol=1e-6), "bypass mismatch"

    print("KERNEL_OK")
</pallas_src>

<mosaic_0001>
module attributes {stable_mosaic.version = 11 : i64} {
  func.func @_linear_policy_kernel(%arg0: i32, %arg1: memref<1xf32, #tpu.memory_space<smem>>, %arg2: memref<8x128xf32, #tpu.memory_space<vmem>>, %arg3: memref<8x128xf32, #tpu.memory_space<vmem>>) attributes {dimension_semantics = [#tpu.dimension_semantics<parallel>], iteration_bounds = array<i64: 1>, scalar_prefetch = 0 : i64, scratch_operands = 0 : i64, tpu.core_type = #tpu.core_type<tc>, window_params = [{transform_indices = @transform_0, window_bounds = array<i64: 1>}, {transform_indices = @transform_1, window_bounds = array<i64: 8, 128>}, {transform_indices = @transform_2, window_bounds = array<i64: 8, 128>}]} {
    %c0 = arith.constant 0 : index
    %0 = memref.load %arg1[%c0] : memref<1xf32, #tpu.memory_space<smem>>
    %c0_0 = arith.constant 0 : index
    %c0_1 = arith.constant 0 : index
    %1 = vector.load %arg2[%c0_0, %c0_1] : memref<8x128xf32, #tpu.memory_space<vmem>>, vector<8x128xf32>
    %cst = arith.constant 9.700000e-01 : f32
    %cst_2 = arith.constant 1.030000e+00 : f32
    %2 = vector.broadcast %cst : f32 to vector<8x128xf32>
    %3 = arith.maximumf %2, %1 : vector<8x128xf32>
    %4 = vector.broadcast %cst_2 : f32 to vector<8x128xf32>
    %5 = arith.minimumf %4, %3 : vector<8x128xf32>
    %6 = arith.subf %1, %5 : vector<8x128xf32>
    %7 = arith.mulf %0, %0 : f32
    %8 = vector.broadcast %7 : f32 to vector<8x128xf32>
    %9 = arith.mulf %6, %8 : vector<8x128xf32>
    %c0_3 = arith.constant 0 : index
    %c0_4 = arith.constant 0 : index
    %10 = vector.load %arg3[%c0_3, %c0_4] : memref<8x128xf32, #tpu.memory_space<vmem>>, vector<8x128xf32>
    tpu.vector_store %arg3[%c0_3, %c0_4], %9 {strides = array<i32>} : memref<8x128xf32, #tpu.memory_space<vmem>>, vector<8x128xf32>,
    return
  }
  func.func @transform_0(%arg0: i32) -> i32 {
    %c0_i32 = arith.constant 0 : i32
    %c0_i32_0 = arith.constant 0 : i32
    return %c0_i32 : i32
  }
  func.func @transform_1(%arg0: i32) -> (i32, i32) {
    %c0_i32 = arith.constant 0 : i32
    %c0_i32_0 = arith.constant 0 : i32
    return %arg0, %c0_i32 : i32, i32
  }
  func.func @transform_2(%arg0: i32) -> (i32, i32) {
    %c0_i32 = arith.constant 0 : i32
    %c0_i32_0 = arith.constant 0 : i32
    return %arg0, %c0_i32 : i32, i32
  }
}

</mosaic_0001>

<llo_original>
// kernel: tpu_custom_call.1
$region0: #{tpu_custom_call.1}
  #allocation0 [shape = 'u32[]', space=smem, size = 0x4, offset = 0x4, fixed_abs, tag = 'smem constant byte address 0x4 - core index']
  #allocation1 [shape = 'u32[144,128]{1,0:T(1,128)}', space=vmem, size = 0x12000, scoped, tag = 'internal scratch']
  #allocation2 [shape = 'f32[1]{0:T(128)S(6)}', space=smem, size = 0x200, scoped, tag = 'scoped memory for tpu_custom_call.1']
  %s0 = inlined_call_operand.<no memory space> [shape: f32[1], index: 0, kind: input, shape index: {}]
  %s1 = inlined_call_operand.hbm [shape: f32[8,128], index: 1, kind: input, shape index: {}]
  %s2 = inlined_call_operand.hbm [shape: f32[8,128], index: 2, kind: output, shape index: {}]
  %s3 = sld [smem:[#allocation0]]
  $region22: #{tpu_custom_call.1} parent=0
    _
  %s5 = ssub.s32 1, %s3
  %s6 = scalar_select 0, %s5, %s3
  %7 = sst [smem:[#allocation2]] %s0
  $region1: #{tpu_custom_call.1} parent=0
    #allocation3 [shape = 'u8[4096]{0}', space=vmem, size = 0x1000, scoped, tag = 'input window, operand 1, single buffered']
    #allocation4 [shape = 's32[1]{0}', space=sflag, size = 0x4, scoped, tag = 'scoped memory for tpu_custom_call.1']
    #allocation5 [shape = 's32[1]{0}', space=sflag, size = 0x4, scoped, tag = 'scoped memory for tpu_custom_call.1']
    #allocation6 [shape = 'u8[4096]{0}', space=vmem, size = 0x1000, scoped, tag = 'output window, operand 0, single buffered']
    %8 = vsyncpa [#allocation4], 0
    %9 = vsyncpa [#allocation5], 0
    // Predicated region
    $region2: #{tpu_custom_call.1} parent=1 // pred_check
      _
    $region3: #{tpu_custom_call.1} parent=1 // pred_check_branch
      %11 = sbr.rel (0) target = $region5
    $region4: #{tpu_custom_call.1} parent=1 // pred_region
      _
    $region5: #{tpu_custom_call.1} parent=1 // pred_fallthru
      _
    // Predicated region
    $region6: #{tpu_custom_call.1} parent=1 // pred_check
      _
    $region7: #{tpu_custom_call.1} parent=1 // pred_check_branch
      %13 = sbr.rel (0) target = $region9
    $region8: #{tpu_custom_call.1} parent=1 // pred_region
      %s15 = ssub.s32 128, 128
      %16 = vsyncadd [#allocation4], %s15
      %s18 = sshll.u32 [#allocation3], 4
      %s19 = int_to_ptr.vmem [resolvable:$true] %s18
      %21 = dma.hbm_to_vmem [thread:$0]  %s1, 128, %s19, [#allocation4]
    $region9: #{tpu_custom_call.1} parent=1 // pred_fallthru
      _
    // Predicated region
    $region10: #{tpu_custom_call.1} parent=1 // pred_check
      _
    $region11: #{tpu_custom_call.1} parent=1 // pred_check_branch
      %23 = sbr.rel (0) target = $region13
    $region12: #{tpu_custom_call.1} parent=1 // pred_region
      %24 = dma.done [#allocation4], 128
    $region13: #{tpu_custom_call.1} parent=1 // pred_fallthru
      _
    %s25 = sld [smem:[#allocation2]]
    %v26 = vld [vmem:[#allocation3] sm:$0xff]
    %v27 = vmax.f32 %v26, 0.97
    %v28 = vmin.f32 %v27, 1.03
    %v29 = vsub.f32 %v26, %v28
    %s30 = smul.f32 %s25, %s25
    %v31 = vstv %s30
    %v32 = vmul.f32 %v29, %v31
    %33 = vst [vmem:[#allocation6] sm:$0xff] %v32
    // Predicated region
    $region14: #{tpu_custom_call.1} parent=1 // pred_check
      _
    $region15: #{tpu_custom_call.1} parent=1 // pred_check_branch
      %35 = sbr.rel (0) target = $region17
    $region16: #{tpu_custom_call.1} parent=1 // pred_region
      %s37 = ssub.s32 128, 128
      %38 = vsyncadd [#allocation5], %s37
      %s40 = sshll.u32 [#allocation6], 4
      %s41 = int_to_ptr.vmem [resolvable:$true] %s40
      %43 = dma.vmem_to_hbm [thread:$0]  %s41, 128, %s2, [#allocation5]
    $region17: #{tpu_custom_call.1} parent=1 // pred_fallthru
      _
    // Predicated region
    $region18: #{tpu_custom_call.1} parent=1 // pred_check
      _
    $region19: #{tpu_custom_call.1} parent=1 // pred_check_branch
      %45 = sbr.rel (0) target = $region21
    $region20: #{tpu_custom_call.1} parent=1 // pred_region
      %46 = dma.done [#allocation5], 128
    $region21: #{tpu_custom_call.1} parent=1 // pred_fallthru
      _
    %47 = vsyncpa [#allocation4], 1
    %48 = vsyncpa [#allocation5], 1

</llo_original>
